<compile_context>
chip_gen: v7x
topology: tpu7x:2x2x1
jax: 0.10.0
libtpu: 0.0.40
codegen_flags: <defaults>
</compile_context>

<pallas_src>
import jax
import jax.numpy as jnp
from jax.experimental import pallas as pl
from jax.experimental.pallas import tpu as pltpu


def _vmem_capacity_bytes():
    try:
        return int(pltpu.get_tpu_info().vmem_capacity_bytes)
    except Exception:
        return 64 * 1024 * 1024  # conservative (v7x per-TC) fallback


def _round_up(x, m):
    return ((x + m - 1) // m) * m


def frame_alignment(score, feature, learned_template, *,
                    emit_path=True,
                    path_dtype=jnp.float32,
                    compute_dtype=jnp.bfloat16,
                    exp_dtype=jnp.float32,
                    tq=None, tb=None, tf=None,
                    vmem_limit_bytes=None):
    """NAFA FrameAlignment forward.

    Args:
      score:            [B, S, 1] conditioning scores.
      feature:          [B, S, F] features.
      learned_template: [1, S, 1] learnable template parameter.
      emit_path:        materialize the [B, S, S] soft aligning path output
                        (the dominant HBM traffic when S > F). False returns
                        only the aligned feature.
      path_dtype:       dtype of the emitted path (bf16 halves writeback).
      compute_dtype:    MXU matmul dtype. bfloat16 is the production default;
                        float32 gives exact parity with the PyTorch f32
                        reference (validation only; ~3x MXU cost, worst on v5e).
      exp_dtype:        bfloat16 roughly doubles EUP exp throughput on
                        v6e/v7x (do NOT use on v5e; loosens path tolerance).

    Returns:
      (aligned_feature [B,S,F], soft_path [B,S,S]) if emit_path else
      aligned_feature.
    """
    B, S, F = feature.shape
    assert score.shape == (B, S, 1)
    assert learned_template.shape == (1, S, 1)

    in_itemsize = jnp.dtype(feature.dtype).itemsize
    sc_itemsize = jnp.dtype(score.dtype).itemsize
    p_itemsize = jnp.dtype(path_dtype).itemsize if emit_path else 0

    # ---- generation-aware VMEM budgets --------------------------------------
    cap = _vmem_capacity_bytes()
    if vmem_limit_bytes is None:
        # ~50 MiB on v7x (64 MiB VMEM), ~100 MiB on v5e/v6e (128 MiB VMEM).
        vmem_limit_bytes = min(int(cap * 0.78), 100 * 1024 * 1024)
    vmem_limit_bytes = int(vmem_limit_bytes)
    budget = int(vmem_limit_bytes * 0.8)  # headroom for compiler scratch

    # ---- feature lane padding / F tiling ------------------------------------
    feat_budget = budget // 3
    single_feat_fits = S * F * in_itemsize <= feat_budget
    # Pad F to a lane-dense multiple of 128 when (a) F must be tiled (tiling
    # needs a 128-multiple tf) or (b) the path is not emitted and the aligned
    # output would otherwise hit masked partial stores (F % 128 != 0).
    do_pad = (F % 128 != 0) and ((not single_feat_fits) or (not emit_path))
    Fp = _round_up(F, 128) if do_pad else F

    feat_buffers = 2
    if tf is None:
        if 2 * S * Fp * in_itemsize <= feat_budget:
            tf = Fp                                    # resident, double-buffered
        elif S * Fp * in_itemsize <= feat_budget:
            tf = Fp                                    # resident, single-buffered
            feat_buffers = 1
        else:                                          # tile F
            tf = max(128, ((feat_budget // (2 * S * in_itemsize)) // 128) * 128)
            tf = min(tf, Fp)
    tf = min(tf, Fp)
    nf = pl.cdiv(Fp, tf)
    if nf > 1:
        feat_buffers = 2  # feature block index changes every fi step

    # ---- row tiling (tq) -----------------------------------------------------
    # Per tq row (tb = 1): f32 softmax temporaries counted 3x (dist + exps
    # live values + the path scratch), path / aligned outputs double-buffered,
    # score block 128x lane-padded (last dim is 1).
    per_row = (2 * 128 * sc_itemsize          # score (lane-padded), 2 buffers
               + 2 * tf * in_itemsize         # aligned out, 2 buffers
               + 2 * S * p_itemsize           # soft path out, 2 buffers
               + 1 * S * 4                    # path scratch (f32)
               + 2 * S * 4)                   # dist / exps live f32 temps
    fixed = feat_buffers * S * tf * in_itemsize + 8 * S * 4  # feature + template
    if tq is None:
        avail = max(budget - fixed, per_row)
        tq = max(1, avail // per_row)
        if tq >= S or S <= 128:
            tq = S
        else:
            tq = min(S, max(128, (tq // 128) * 128))
    tq = min(tq, S)

    # ---- batch tiling (tb) ---------------------------------------------------
    if tb is None:
        per_batch = feat_buffers * S * tf * in_itemsize + tq * per_row
        tb = max(1, min(B, budget // max(per_batch, 1)))
    tb = min(tb, B)

    nb = pl.cdiv(B, tb)
    nq = pl.cdiv(S, tq)
    grid = (nb, nq, nf)

    # v7x (2 TCs): shard the batch axis so each resident feature block is read
    # exactly once; shard rows only when there is a single batch tile. The fi
    # axis carries the path-scratch dependency -> arbitrary.
    if nb >= 2:
        dims = ("parallel", "arbitrary", "arbitrary")
    else:
        dims = ("arbitrary", "parallel", "arbitrary")

    # Lane-dense template [1,1,S]: avoids an in-kernel (S,1)->(1,S) relayout
    # and the 128x lane padding of a last-dim-1 block.
    tmpl_row = jnp.swapaxes(learned_template, 1, 2)           # (1, 1, S)
    feat_in = feature if Fp == F else jnp.pad(
        feature, ((0, 0), (0, 0), (0, Fp - F)))

    exp_is_f32 = jnp.dtype(exp_dtype) == jnp.dtype(jnp.float32)

    # ---- kernel body ---------------------------------------------------------
    def kernel(score_ref, tmpl_ref, feat_ref, *rest):
        # score_ref: (tb, tq, 1)   tmpl_ref: (1, 1, S)   feat_ref: (tb, S, tf)
        # out_ref  : (tb, tq, tf) [path_ref: (tb, tq, S)]  path_scr: (tb, tq, S)
        if emit_path:
            out_ref, path_ref, path_scr = rest
        else:
            out_ref, path_scr = rest
            path_ref = None

        fi = pl.program_id(2)

        @pl.when(fi == 0)
        def _():
            # softmax(-D - rowmax(D)) == softmax(-D); fused single-shift form:
            # exp(rowmin(D) - D) / sum, exponent <= 0 so no overflow.
            dist = jnp.abs(score_ref[...] - tmpl_ref[...])        # (tb, tq, S)
            row_min = jnp.min(dist, axis=-1, keepdims=True)       # (tb, tq, 1)
            shifted = row_min - dist
            if exp_is_f32:
                exps = jnp.exp(shifted)
            else:
                exps = jnp.exp(shifted.astype(exp_dtype)).astype(jnp.float32)
            denom = jnp.sum(exps, axis=-1, keepdims=True)
            path = exps * pl.reciprocal(denom)                    # exact recip
            path_scr[...] = path
            if path_ref is not None:
                path_ref[...] = path.astype(path_ref.dtype)

        # path @ feature on the MXU (f32 accumulation). Path is reused from
        # VMEM scratch across all F tiles (softmax computed once per row tile).
        p = path_scr[...]
        aligned = jnp.einsum(
            "bqs,bsf->bqf",
            p.astype(compute_dtype),
            feat_ref[...].astype(compute_dtype),
            preferred_element_type=jnp.float32)
        out_ref[...] = aligned.astype(out_ref.dtype)

    feat_spec_kwargs = {}
    if feat_buffers == 1:
        # Resident across qi (index only changes with bi): the 2nd buffer would
        # only hide batch-boundary refills; drop it and spend the VMEM on tq.
        feat_spec_kwargs["pipeline_mode"] = pl.Buffered(1)

    in_specs = [
        pl.BlockSpec((tb, tq, 1), lambda bi, qi, fi: (bi, qi, 0)),   # score
        pl.BlockSpec((1, 1, S), lambda bi, qi, fi: (0, 0, 0)),       # template
        pl.BlockSpec((tb, S, tf), lambda bi, qi, fi: (bi, 0, fi),    # feature
                     **feat_spec_kwargs),
    ]

    aligned_spec = pl.BlockSpec((tb, tq, tf), lambda bi, qi, fi: (bi, qi, fi))
    aligned_shape = jax.ShapeDtypeStruct((B, S, Fp), feature.dtype)
    if emit_path:
        out_specs = (aligned_spec,
                     pl.BlockSpec((tb, tq, S), lambda bi, qi, fi: (bi, qi, 0)))
        out_shape = (aligned_shape,
                     jax.ShapeDtypeStruct((B, S, S), path_dtype))
    else:
        out_specs = aligned_spec
        out_shape = aligned_shape

    grid_spec = pltpu.PrefetchScalarGridSpec(
        num_scalar_prefetch=0,
        grid=grid,
        in_specs=in_specs,
        out_specs=out_specs,
        scratch_shapes=[pltpu.VMEM((tb, tq, S), jnp.float32)],
    )

    result = pl.pallas_call(
        kernel,
        out_shape=out_shape,
        grid_spec=grid_spec,
        compiler_params=pltpu.CompilerParams(
            dimension_semantics=dims,
            vmem_limit_bytes=vmem_limit_bytes,
        ),
    )(score, tmpl_row, feat_in)

    if emit_path:
        aligned, path = result
    else:
        aligned, path = result, None
    if Fp != F:
        aligned = aligned[..., :F]
    return (aligned, path) if emit_path else aligned


def frame_alignment_reference(score, feature, learned_template):
    """Pure-JAX reference mirroring the PyTorch forward."""
    dist = jnp.abs(score - jnp.swapaxes(learned_template, 1, 2))   # [B, S, S]
    row_max = jnp.max(dist, axis=-1, keepdims=True)
    path = jax.nn.softmax(-dist - row_max, axis=-1)
    aligned = jnp.einsum("bij,bjf->bif", path, feature)
    return aligned, path


if __name__ == "__main__":
    B, S, F = 2, 8, 32

    key = jax.random.PRNGKey(0)
    k_tmpl, k_score, k_feat = jax.random.split(key, 3)

    # Deterministic "learnable" parameter: torch.randn(1, seq_len, 1) analogue.
    learned_template = jax.random.normal(k_tmpl, (1, S, 1), dtype=jnp.float32)
    score = jax.random.normal(k_score, (B, S, 1), dtype=jnp.float32)
    feature = jax.random.normal(k_feat, (B, S, F), dtype=jnp.float32)

    # Exact-semantics run (f32 matmul), fast default run (bf16 MXU), and a
    # no-path run exercising the lane-dense F-padding path.
    aligned_f32, path_f32 = frame_alignment(
        score, feature, learned_template, compute_dtype=jnp.float32)
    aligned_bf16, path_bf16 = frame_alignment(score, feature, learned_template)
    aligned_nopath = frame_alignment(
        score, feature, learned_template,
        compute_dtype=jnp.float32, emit_path=False)
    jax.block_until_ready(
        (aligned_f32, path_f32, aligned_bf16, path_bf16, aligned_nopath))

    aligned_exp, path_exp = frame_alignment_reference(
        score, feature, learned_template)

    # f32 path matches the PyTorch-equivalent reference tightly.
    assert jnp.allclose(aligned_f32, aligned_exp, atol=1e-5, rtol=1e-5)
    assert jnp.allclose(path_f32, path_exp, atol=1e-5, rtol=1e-5)
    # bf16 matmul keeps the path exact (f32) and the aligned feature ~1e-2.
    assert jnp.allclose(path_bf16, path_exp, atol=1e-5, rtol=1e-5)
    assert jnp.allclose(aligned_bf16, aligned_exp, atol=5e-2, rtol=5e-2)
    # Path-free variant (f32 matmul, F zero-padded to 128 lanes internally).
    assert jnp.allclose(aligned_nopath, aligned_exp, atol=1e-5, rtol=1e-5)

    print("KERNEL_OK")
</pallas_src>

<mosaic_0001>
module attributes {stable_mosaic.version = 11 : i64} {
  func.func @kernel(%arg0: i32, %arg1: i32, %arg2: i32, %arg3: memref<2x8x1xf32, #tpu.memory_space<vmem>>, %arg4: memref<1x1x8xf32, #tpu.memory_space<vmem>>, %arg5: memref<2x8x32xf32, #tpu.memory_space<vmem>>, %arg6: memref<2x8x32xf32, #tpu.memory_space<vmem>>, %arg7: memref<2x8x8xf32, #tpu.memory_space<vmem>>, %arg8: memref<2x8x8xf32, #tpu.memory_space<vmem>>) attributes {dimension_semantics = [#tpu.dimension_semantics<arbitrary>, #tpu.dimension_semantics<parallel>, #tpu.dimension_semantics<arbitrary>], iteration_bounds = array<i64: 1, 1, 1>, scalar_prefetch = 0 : i64, scratch_operands = 1 : i64, tpu.core_type = #tpu.core_type<tc>, window_params = [{transform_indices = @transform_0, window_bounds = array<i64: 2, 8, 1>}, {pipeline_mode = #tpu.pipeline_mode<synchronous>, transform_indices = @transform_1, window_bounds = array<i64: 1, 1, 8>}, {transform_indices = @transform_2, window_bounds = array<i64: 2, 8, 32>}, {transform_indices = @transform_3, window_bounds = array<i64: 2, 8, 32>}, {transform_indices = @transform_4, window_bounds = array<i64: 2, 8, 8>}]} {
    %c0_i32 = arith.constant 0 : i32
    %0 = arith.cmpi eq, %arg2, %c0_i32 : i32
    %1 = arith.extui %0 : i1 to i32
    %c0_i32_0 = arith.constant 0 : i32
    %2 = arith.cmpi ne, %1, %c0_i32_0 : i32
    scf.if %2 {
      %c0_9 = arith.constant 0 : index
      %c0_10 = arith.constant 0 : index
      %c0_11 = arith.constant 0 : index
      %7 = vector.load %arg3[%c0_9, %c0_10, %c0_11] : memref<2x8x1xf32, #tpu.memory_space<vmem>>, vector<2x8x1xf32>
      %c0_12 = arith.constant 0 : index
      %c0_13 = arith.constant 0 : index
      %c0_14 = arith.constant 0 : index
      %8 = vector.load %arg4[%c0_12, %c0_13, %c0_14] : memref<1x1x8xf32, #tpu.memory_space<vmem>>, vector<1x1x8xf32>
      %9 = vector.broadcast %7 : vector<2x8x1xf32> to vector<2x8x8xf32>
      %10 = vector.broadcast %8 : vector<1x1x8xf32> to vector<2x8x8xf32>
      %11 = arith.subf %9, %10 : vector<2x8x8xf32>
      %12 = math.absf %11 : vector<2x8x8xf32>
      %cst_15 = arith.constant dense<0x7F800000> : vector<2x8xf32>
      %13 = vector.multi_reduction <minimumf>, %12, %cst_15 [2] : vector<2x8x8xf32> to vector<2x8xf32>
      %14 = vector.shape_cast %13 : vector<2x8xf32> to vector<2x8x1xf32>
      %15 = vector.broadcast %14 : vector<2x8x1xf32> to vector<2x8x8xf32>
      %16 = arith.subf %15, %12 : vector<2x8x8xf32>
      %17 = math.exp %16 : vector<2x8x8xf32>
      %cst_16 = arith.constant dense<0.000000e+00> : vector<2x8xf32>
      %18 = vector.multi_reduction <add>, %17, %cst_16 [2] : vector<2x8x8xf32> to vector<2x8xf32>
      %19 = vector.shape_cast %18 : vector<2x8xf32> to vector<2x8x1xf32>
      %20 = tpu.reciprocal %19 : vector<2x8x1xf32> -> vector<2x8x1xf32>
      %21 = vector.broadcast %20 : vector<2x8x1xf32> to vector<2x8x8xf32>
      %22 = arith.mulf %17, %21 : vector<2x8x8xf32>
      %c0_17 = arith.constant 0 : index
      %c0_18 = arith.constant 0 : index
      %c0_19 = arith.constant 0 : index
      %23 = vector.load %arg8[%c0_17, %c0_18, %c0_19] : memref<2x8x8xf32, #tpu.memory_space<vmem>>, vector<2x8x8xf32>
      tpu.vector_store %arg8[%c0_17, %c0_18, %c0_19], %22 {strides = array<i32>} : memref<2x8x8xf32, #tpu.memory_space<vmem>>, vector<2x8x8xf32>,
      %c0_20 = arith.constant 0 : index
      %c0_21 = arith.constant 0 : index
      %c0_22 = arith.constant 0 : index
      %24 = vector.load %arg7[%c0_20, %c0_21, %c0_22] : memref<2x8x8xf32, #tpu.memory_space<vmem>>, vector<2x8x8xf32>
      tpu.vector_store %arg7[%c0_20, %c0_21, %c0_22], %22 {strides = array<i32>} : memref<2x8x8xf32, #tpu.memory_space<vmem>>, vector<2x8x8xf32>,
    } else {
    }
    %c0 = arith.constant 0 : index
    %c0_1 = arith.constant 0 : index
    %c0_2 = arith.constant 0 : index
    %3 = vector.load %arg8[%c0, %c0_1, %c0_2] : memref<2x8x8xf32, #tpu.memory_space<vmem>>, vector<2x8x8xf32>
    %c0_3 = arith.constant 0 : index
    %c0_4 = arith.constant 0 : index
    %c0_5 = arith.constant 0 : index
    %4 = vector.load %arg5[%c0_3, %c0_4, %c0_5] : memref<2x8x32xf32, #tpu.memory_space<vmem>>, vector<2x8x32xf32>
    "tpu.trace_start"() <{level = 10 : i32, message = "bqs,bsf->bqf"}> : () -> ()
    %cst = arith.constant dense<0.000000e+00> : vector<2x8x32xf32>
    %5 = tpu.matmul %3, %4, %cst {dimension_numbers = #tpu.dot_dimension_numbers<[2], [1], [1], [2], [0, 0, 0, 1, 1, 2], [0], [0]>} : vector<2x8x8xf32>, vector<2x8x32xf32>, vector<2x8x32xf32> -> vector<2x8x32xf32>
    "tpu.trace_stop"() : () -> ()
    %c0_6 = arith.constant 0 : index
    %c0_7 = arith.constant 0 : index
    %c0_8 = arith.constant 0 : index
    %6 = vector.load %arg6[%c0_6, %c0_7, %c0_8] : memref<2x8x32xf32, #tpu.memory_space<vmem>>, vector<2x8x32xf32>
    tpu.vector_store %arg6[%c0_6, %c0_7, %c0_8], %5 {strides = array<i32>} : memref<2x8x32xf32, #tpu.memory_space<vmem>>, vector<2x8x32xf32>,
    return
  }
  func.func @transform_0(%arg0: i32, %arg1: i32, %arg2: i32) -> (i32, i32, i32) {
    %c0_i32 = arith.constant 0 : i32
    %c0_i32_0 = arith.constant 0 : i32
    return %arg0, %arg1, %c0_i32 : i32, i32, i32
  }
  func.func @transform_1(%arg0: i32, %arg1: i32, %arg2: i32) -> (i32, i32, i32) {
    %c0_i32 = arith.constant 0 : i32
    %c0_i32_0 = arith.constant 0 : i32
    %c0_i32_1 = arith.constant 0 : i32
    %c0_i32_2 = arith.constant 0 : i32
    return %c0_i32, %c0_i32_0, %c0_i32_1 : i32, i32, i32
  }
  func.func @transform_2(%arg0: i32, %arg1: i32, %arg2: i32) -> (i32, i32, i32) {
    %c0_i32 = arith.constant 0 : i32
    %c0_i32_0 = arith.constant 0 : i32
    return %arg0, %c0_i32, %arg2 : i32, i32, i32
  }
  func.func @transform_3(%arg0: i32, %arg1: i32, %arg2: i32) -> (i32, i32, i32) {
    %c0_i32 = arith.constant 0 : i32
    return %arg0, %arg1, %arg2 : i32, i32, i32
  }
  func.func @transform_4(%arg0: i32, %arg1: i32, %arg2: i32) -> (i32, i32, i32) {
    %c0_i32 = arith.constant 0 : i32
    %c0_i32_0 = arith.constant 0 : i32
    return %arg0, %arg1, %c0_i32 : i32, i32, i32
  }
}

</mosaic_0001>

<llo_original>
// kernel: tpu_custom_call.1
$region0: #{tpu_custom_call.1}
  #allocation0 [shape = 'u32[]', space=smem, size = 0x4, offset = 0x4, fixed_abs, tag = 'smem constant byte address 0x4 - core index']
  #allocation1 [shape = 'u32[144,128]{1,0:T(1,128)}', space=vmem, size = 0x12000, scoped, tag = 'internal scratch']
  #allocation2 [shape = 'f32[2,8,8]{2,1,0:T(8,128)}', space=vmem, size = 0x2000, scoped, tag = 'scratch operand']
  %s0 = inlined_call_operand.vmem [shape: f32[2,8,1], index: 0, kind: input, shape index: {}]
  %s1 = inlined_call_operand.vmem [shape: f32[1,1,8], index: 1, kind: input, shape index: {}]
  %s2 = inlined_call_operand.vmem [shape: f32[2,8,32], index: 2, kind: input, shape index: {}]
  %s3 = inlined_call_operand.hbm [shape: f32[2,8,32], index: 3, kind: output, shape index: {0}]
  %s4 = inlined_call_operand.hbm [shape: f32[2,8,8], index: 4, kind: output, shape index: {1}]
  %5 = xla_tuple %s3, %s4
  %s6 = sld [smem:[#allocation0]]
  $region34: #{tpu_custom_call.1} parent=0
    _
  %s8 = ssub.s32 1, %s6
  %s9 = scalar_select 0, %s8, %s6
  $region1: #{tpu_custom_call.1} parent=0
    #allocation3 [shape = 'u8[8192]{0}', space=vmem, size = 0x2000, scoped, tag = 'output window, operand 0, single buffered']
    #allocation4 [shape = 's32[1]{0}', space=sflag, size = 0x4, scoped, tag = 'scoped memory for tpu_custom_call.1']
    #allocation5 [shape = 'u8[8192]{0}', space=vmem, size = 0x2000, scoped, tag = 'output window, operand 1, single buffered']
    #allocation6 [shape = 's32[1]{0}', space=sflag, size = 0x4, scoped, tag = 'scoped memory for tpu_custom_call.1']
    %10 = vsyncpa [#allocation4], 0
    %11 = vsyncpa [#allocation6], 0
    // Predicated region
    $region2: #{tpu_custom_call.1} parent=1 // pred_check
      _
    $region3: #{tpu_custom_call.1} parent=1 // pred_check_branch
      %13 = sbr.rel (0) target = $region5
    $region4: #{tpu_custom_call.1} parent=1 // pred_region
      _
    $region5: #{tpu_custom_call.1} parent=1 // pred_fallthru
      _
    // Predicated region
    $region6: #{tpu_custom_call.1} parent=1 // pred_check
      _
    $region7: #{tpu_custom_call.1} parent=1 // pred_check_branch
      %15 = sbr.rel (0) target = $region9
    $region8: #{tpu_custom_call.1} parent=1 // pred_region
      _
    $region9: #{tpu_custom_call.1} parent=1 // pred_fallthru
      _
    // Predicated region
    $region10: #{tpu_custom_call.1} parent=1 // pred_check
      _
    $region11: #{tpu_custom_call.1} parent=1 // pred_check_branch
      %17 = sbr.rel (0) target = $region13
    $region12: #{tpu_custom_call.1} parent=1 // pred_region
      _
    $region13: #{tpu_custom_call.1} parent=1 // pred_fallthru
      _
    %p18 = scmp.eq.s32.totalorder 0, 0
    // Predicated region
    $region14: #{tpu_custom_call.1} parent=1 // pred_check
      %p19 = pneg %p18
    $region15: #{tpu_custom_call.1} parent=1 // pred_check_branch
      %21 = sbr.rel (%p19) target = $region17
    $region16: #{tpu_custom_call.1} parent=1 // pred_region
      %v22 = vld [vmem:[%s0] sm:$0xff]
      %v23 = vld [vmem:[%s0 + $0x8] sm:$0xff]
      %v24 = vld [vmem:[%s1] sm:$0x1]
      %26 = vset.pattern.permute.xlu0 0
      %27 = vperm.xlu0 %26, %v22
      %v28 = vpop.permute.xlu0 %27
      %31 = vset.pattern.permute.xlu0 0
      %32 = vperm.xlu0 %31, %v23
      %v33 = vpop.permute.xlu0 %32
      %v36 = vlaneseq
      %v37 = vshrl.u32 %v36, 7
      %v38 = vsub.s32 0, %v37
      %v39 = vrot.slane %v24, %v38
      %v41 = vsub.f32 %v28, %v39
      %v42 = vsub.f32 %v33, %v39
      %v43 = vand.u32 2147483647, %v41
      %v44 = vand.u32 2147483647, %v42
      %vm45 = vcmask 64512
      %v46 = vsel %vm45, %v43, inf
      %47 = vmin.xlane.f32.xlu0 %v46
      %v48 = vpop.xlane.xlu0 %47
      %v49 = vsel %vm45, %v44, inf
      %50 = vmin.xlane.f32.xlu0 %v49
      %v51 = vpop.xlane.xlu0 %50
      %v52 = vsub.f32 %v48, %v43
      %v53 = vsub.f32 %v51, %v44
      %v54 = vmul.f32 %v52, 1.442695
      %v55 = vpow.pop %v54
      %v56 = vmul.f32 %v53, 1.442695
      %v57 = vpow.pop %v56
      %v58 = vsel %vm45, %v55, 0.0
      %59 = vadd.xlane.f32.xlu0 %v58
      %v60 = vpop.xlane.xlu0 %59
      %v61 = vsel %vm45, %v57, 0.0
      %62 = vadd.xlane.f32.xlu0 %v61
      %v63 = vpop.xlane.xlu0 %62
      %v64 = vrcp.pop %v60
      %v65 = vrcp.pop %v63
      %v66 = vmul.f32 %v55, %v64
      %v67 = vmul.f32 %v57, %v65
      %68 = vst.msk [vmem:[#allocation2] sm:$0xff] %vm45, %v66
      %69 = vst.msk [vmem:[#allocation2 + $0x8] sm:$0xff] %vm45, %v67
      %70 = vst.msk [vmem:[#allocation5] sm:$0xff] %vm45, %v66
      %71 = vst.msk [vmem:[#allocation5 + $0x8] sm:$0xff] %vm45, %v67
    $region17: #{tpu_custom_call.1} parent=1 // pred_fallthru
      _
    %v72 = vld [vmem:[#allocation2] sm:$0xff]
    %v73 = vld [vmem:[#allocation2 + $0x8] sm:$0xff]
    %v74 = vld [vmem:[%s2] sm:$0xff]
    %v75 = vld [vmem:[%s2 + $0x8] sm:$0xff]
    %vm76 = vcmask 64512
    %v78 = vsel %vm76, %v72, 0
    %80 = vmatprep.subr.mxu0 0.0
    %81 = vmatpush1.msra.mxu0 %v74
    %82 = vmatprep.subr.mxu0 0.0
    %83 = vmatpush1.msra.mxu0 0.0
    %84 = vmatprep.subr.mxu0 0.0
    %85 = vmatpush1.msra.mxu0 0.0
    %86 = vmatprep.subr.mxu0 0.0
    %87 = vmatpush1.msra.mxu0 0.0
    %88 = vmatprep.subr.mxu0 0.0
    %89 = vmatpush1.msra.mxu0 0.0
    %90 = vmatprep.subr.mxu0 0.0
    %91 = vmatpush1.msra.mxu0 0.0
    %92 = vmatprep.subr.mxu0 0.0
    %93 = vmatpush1.msra.mxu0 0.0
    %94 = vmatprep.subr.mxu0 0.0
    %95 = vmatpush1.msra.mxu0 0.0
    %96 = vmatprep.subr.mxu0 0.0
    %97 = vmatpush1.msra.mxu0 0.0
    %98 = vmatprep.subr.mxu0 0.0
    %99 = vmatpush1.msra.mxu0 0.0
    %100 = vmatprep.subr.mxu0 0.0
    %101 = vmatpush1.msra.mxu0 0.0
    %102 = vmatprep.subr.mxu0 0.0
    %103 = vmatpush1.msra.mxu0 0.0
    %104 = vmatprep.subr.mxu0 0.0
    %105 = vmatpush1.msra.mxu0 0.0
    %106 = vmatprep.subr.mxu0 0.0
    %107 = vmatpush1.msra.mxu0 0.0
    %108 = vmatprep.subr.mxu0 0.0
    %109 = vmatpush1.msra.mxu0 0.0
    %110 = vmatprep.subr.mxu0 0.0
    %111 = vmatpush1.msra.mxu0 0.0
    %112 = vmatprep.subr.mxu0 0.0
    %113 = vmatpush1.msra.mxu0 0.0
    %114 = vmatprep.subr.mxu0 0.0
    %115 = vmatpush1.msra.mxu0 0.0
    %116 = vmatprep.subr.mxu0 0.0
    %117 = vmatpush1.msra.mxu0 0.0
    %118 = vmatprep.subr.mxu0 0.0
    %119 = vmatpush1.msra.mxu0 0.0
    %120 = vmatprep.subr.mxu0 0.0
    %121 = vmatpush1.msra.mxu0 0.0
    %122 = vmatprep.subr.mxu0 0.0
    %123 = vmatpush1.msra.mxu0 0.0
    %124 = vmatprep.subr.mxu0 0.0
    %125 = vmatpush1.msra.mxu0 0.0
    %126 = vmatprep.subr.mxu0 0.0
    %127 = vmatpush1.msra.mxu0 0.0
    %128 = vmatprep.subr.mxu0 0.0
    %129 = vmatpush1.msra.mxu0 0.0
    %130 = vmatprep.subr.mxu0 0.0
    %131 = vmatpush1.msra.mxu0 0.0
    %132 = vmatprep.subr.mxu0 0.0
    %133 = vmatpush1.msra.mxu0 0.0
    %134 = vmatprep.subr.mxu0 0.0
    %135 = vmatpush1.msra.mxu0 0.0
    %136 = vmatprep.subr.mxu0 0.0
    %137 = vmatpush1.msra.mxu0 0.0
    %138 = vmatprep.subr.mxu0 0.0
    %139 = vmatpush1.msra.mxu0 0.0
    %140 = vmatprep.subr.mxu0 0.0
    %141 = vmatpush1.msra.mxu0 0.0
    %142 = vmatprep.subr.mxu0 0.0
    %143 = vmatpush1.msra.mxu0 0.0
    %144 = vmatprep.mubr.f32.mxu0 0.0
    %145 = vmatmul.mubr.f32.gmra.mrb[0].mxu0 %v78
    %v146 = vpop.f32.mrb[0].mxu0
    %v147 = vadd.f32 0.0, %v146
    %v148 = vpop.f32.mrb[0].mxu0
    %149 = vdwg.mxu0
    %v151 = vsel %vm76, %v73, 0
    %153 = vmatprep.subr.mxu0 0.0
    %154 = vmatpush1.msra.mxu0 %v75
    %155 = vmatprep.subr.mxu0 0.0
    %156 = vmatpush1.msra.mxu0 0.0
    %157 = vmatprep.subr.mxu0 0.0
    %158 = vmatpush1.msra.mxu0 0.0
    %159 = vmatprep.subr.mxu0 0.0
    %160 = vmatpush1.msra.mxu0 0.0
    %161 = vmatprep.subr.mxu0 0.0
    %162 = vmatpush1.msra.mxu0 0.0
    %163 = vmatprep.subr.mxu0 0.0
    %164 = vmatpush1.msra.mxu0 0.0
    %165 = vmatprep.subr.mxu0 0.0
    %166 = vmatpush1.msra.mxu0 0.0
    %167 = vmatprep.subr.mxu0 0.0
    %168 = vmatpush1.msra.mxu0 0.0
    %169 = vmatprep.subr.mxu0 0.0
    %170 = vmatpush1.msra.mxu0 0.0
    %171 = vmatprep.subr.mxu0 0.0
    %172 = vmatpush1.msra.mxu0 0.0
    %173 = vmatprep.subr.mxu0 0.0
    %174 = vmatpush1.msra.mxu0 0.0
    %175 = vmatprep.subr.mxu0 0.0
    %176 = vmatpush1.msra.mxu0 0.0
    %177 = vmatprep.subr.mxu0 0.0
    %178 = vmatpush1.msra.mxu0 0.0
    %179 = vmatprep.subr.mxu0 0.0
    %180 = vmatpush1.msra.mxu0 0.0
    %181 = vmatprep.subr.mxu0 0.0
    %182 = vmatpush1.msra.mxu0 0.0
    %183 = vmatprep.subr.mxu0 0.0
    %184 = vmatpush1.msra.mxu0 0.0
    %185 = vmatprep.subr.mxu0 0.0
    %186 = vmatpush1.msra.mxu0 0.0
    %187 = vmatprep.subr.mxu0 0.0
    %188 = vmatpush1.msra.mxu0 0.0
    %189 = vmatprep.subr.mxu0 0.0
    %190 = vmatpush1.msra.mxu0 0.0
    %191 = vmatprep.subr.mxu0 0.0
    %192 = vmatpush1.msra.mxu0 0.0
    %193 = vmatprep.subr.mxu0 0.0
    %194 = vmatpush1.msra.mxu0 0.0
    %195 = vmatprep.subr.mxu0 0.0
    %196 = vmatpush1.msra.mxu0 0.0
    %197 = vmatprep.subr.mxu0 0.0
    %198 = vmatpush1.msra.mxu0 0.0
    %199 = vmatprep.subr.mxu0 0.0
    %200 = vmatpush1.msra.mxu0 0.0
    %201 = vmatprep.subr.mxu0 0.0
    %202 = vmatpush1.msra.mxu0 0.0
    %203 = vmatprep.subr.mxu0 0.0
    %204 = vmatpush1.msra.mxu0 0.0
    %205 = vmatprep.subr.mxu0 0.0
    %206 = vmatpush1.msra.mxu0 0.0
    %207 = vmatprep.subr.mxu0 0.0
    %208 = vmatpush1.msra.mxu0 0.0
    %209 = vmatprep.subr.mxu0 0.0
    %210 = vmatpush1.msra.mxu0 0.0
    %211 = vmatprep.subr.mxu0 0.0
    %212 = vmatpush1.msra.mxu0 0.0
    %213 = vmatprep.subr.mxu0 0.0
    %214 = vmatpush1.msra.mxu0 0.0
    %215 = vmatprep.subr.mxu0 0.0
    %216 = vmatpush1.msra.mxu0 0.0
    %217 = vmatprep.mubr.f32.mxu0 0.0
    %218 = vmatmul.mubr.f32.gmra.mrb[0].mxu0 %v151
    %v219 = vpop.f32.mrb[0].mxu0
    %v220 = vadd.f32 0.0, %v219
    %v221 = vpop.f32.mrb[0].mxu0
    %222 = vdwg.mxu0
    %vm223 = vcmask 261120
    %224 = vst.msk [vmem:[#allocation3] sm:$0xff] %vm223, %v147
    %225 = vst.msk [vmem:[#allocation3 + $0x8] sm:$0xff] %vm223, %v220
    // Predicated region
    $region18: #{tpu_custom_call.1} parent=1 // pred_check
      _
    $region19: #{tpu_custom_call.1} parent=1 // pred_check_branch
      %227 = sbr.rel (0) target = $region21
    $region20: #{tpu_custom_call.1} parent=1 // pred_region
      %s229 = ssub.s32 256, 256
      %230 = vsyncadd [#allocation4], %s229
      %s231 = sshll.u32 [#allocation3], 4
      %s232 = int_to_ptr.vmem [resolvable:$true] %s231
      %237 = dma.vmem_to_hbm [thread:$0]  %s232, 256, %s3, [#allocation4], 128, 128, 8
    $region21: #{tpu_custom_call.1} parent=1 // pred_fallthru
      _
    // Predicated region
    $region22: #{tpu_custom_call.1} parent=1 // pred_check
      _
    $region23: #{tpu_custom_call.1} parent=1 // pred_check_branch
      %239 = sbr.rel (0) target = $region25
    $region24: #{tpu_custom_call.1} parent=1 // pred_region
      %s241 = ssub.s32 256, 256
      %242 = vsyncadd [#allocation6], %s241
      %s243 = sshll.u32 [#allocation5], 4
      %s244 = int_to_ptr.vmem [resolvable:$true] %s243
      %249 = dma.vmem_to_hbm [thread:$0]  %s244, 256, %s4, [#allocation6], 128, 128, 8
    $region25: #{tpu_custom_call.1} parent=1 // pred_fallthru
      _
    // Predicated region
    $region26: #{tpu_custom_call.1} parent=1 // pred_check
      _
    $region27: #{tpu_custom_call.1} parent=1 // pred_check_branch
      %251 = sbr.rel (0) target = $region29
    $region28: #{tpu_custom_call.1} parent=1 // pred_region
      %252 = dma.done [#allocation4], 256
    $region29: #{tpu_custom_call.1} parent=1 // pred_fallthru
      _
    // Predicated region
    $region30: #{tpu_custom_call.1} parent=1 // pred_check
      _
    $region31: #{tpu_custom_call.1} parent=1 // pred_check_branch
      %254 = sbr.rel (0) target = $region33
    $region32: #{tpu_custom_call.1} parent=1 // pred_region
      %255 = dma.done [#allocation6], 256
    $region33: #{tpu_custom_call.1} parent=1 // pred_fallthru
      _
    %256 = vsyncpa [#allocation4], 1
    %257 = vsyncpa [#allocation6], 1

</llo_original>
